<compile_context>
chip_gen: v5e
topology: v5e:2x2
jax: 0.10.0
libtpu: 0.0.40
codegen_flags: <defaults>
</compile_context>

<pallas_src>
import functools

import numpy as np

import jax
import jax.numpy as jnp
from jax import lax
from jax.experimental import pallas as pl
from jax.experimental.pallas import tpu as pltpu

MAX_ATOMIC_NUM = 100  # CDVAE default embedding vocabulary


def _round_up(x, m):
    return ((x + m - 1) // m) * m


def _comp_embedding_kernel(row_off_ref, atom_types_ref, batch_ref,
                           inv_counts_ref, emb_ref, out_ref, counts_ref,
                           *, v_pad, window):
    i = pl.program_id(0)

    @pl.when(i == 0)
    def _():
        counts_ref[...] = jnp.zeros_like(counts_ref)

    at = atom_types_ref[...]                 # [T, 1] int32 (1-based; 0 = pad)
    b = batch_ref[...]                       # [1, T] int32 crystal id per atom
    tile = at.shape[0]

    # One-hot over the padded vocabulary: [T, 128] bf16 (0/1 exact in bf16).
    # Padding atoms (type 0 -> index -1) match no column.
    vocab_iota = lax.broadcasted_iota(jnp.int32, (tile, v_pad), 1)
    onehot = (vocab_iota == (at - 1)).astype(jnp.bfloat16)

    # Crystal-window assignment matrix: [W, T] bf16.  Atoms whose crystal id
    # falls outside the window are padding atoms (zero one-hot row anyway).
    row_off = pl.multiple_of(row_off_ref[i], 8)
    seg_iota = lax.broadcasted_iota(jnp.int32, (window, tile), 0)
    assign = (seg_iota == (b - row_off)).astype(jnp.bfloat16)

    # Per-crystal atom-type counts, accumulated in f32 across N tiles; only the
    # W-row window of the resident accumulator is touched each step.
    counts_ref[pl.ds(row_off, window), :] += jnp.dot(
        assign, onehot, preferred_element_type=jnp.float32)      # [W, 128]

    @pl.when(i == pl.num_programs(0) - 1)
    def _():
        comp_sum = jnp.dot(counts_ref[...], emb_ref[...],
                           preferred_element_type=jnp.float32,
                           precision=lax.Precision.HIGHEST)       # [B_pad, D]
        out_ref[...] = (comp_sum * inv_counts_ref[...]).astype(out_ref.dtype)


def _crystal_windows(num_atoms, n_atoms, n_batch, tile, n_grid, b_pad):
    """Per-tile crystal-window start (multiple of 8) and static width W."""
    try:
        na = np.asarray(jax.device_get(num_atoms), dtype=np.int64)
    except Exception:
        # num_atoms is a tracer (wrapper under jit): fall back to full-B window.
        return jnp.zeros((n_grid,), jnp.int32), b_pad
    batch_np = np.repeat(np.arange(n_batch, dtype=np.int64), na)
    n_real = int(batch_np.shape[0])
    starts = np.zeros((n_grid,), np.int64)
    extents = np.full((n_grid,), 8, np.int64)
    for g in range(n_grid):
        lo, hi = g * tile, min((g + 1) * tile, n_real)
        if lo < n_real:
            first, last = int(batch_np[lo]), int(batch_np[hi - 1])
            starts[g] = (first // 8) * 8
            extents[g] = last - starts[g] + 1
    window = int(min(b_pad, _round_up(int(extents.max()), 8)))
    starts = np.clip(starts, 0, b_pad - window)
    return jnp.asarray(starts, dtype=jnp.int32), window


def comp_embedding_forward(atom_types, num_atoms, emb_table, *, n_tile=4096):
    """atom_types: int32 [N] (1-based atomic numbers); num_atoms: int32 [B];
    emb_table: float32 [MAX_ATOMIC_NUM, n_out].  Returns float32 [B, n_out]."""
    n_atoms = int(atom_types.shape[0])
    n_batch = int(num_atoms.shape[0])
    vocab, dim = emb_table.shape

    # N tiling: multiple of 128 lanes, capped at n_tile rows per grid step.
    assert n_tile % 128 == 0
    tile = min(n_tile, _round_up(max(n_atoms, 1), 128))
    n_pad = _round_up(max(n_atoms, 1), tile)
    n_grid = n_pad // tile
    pad = n_pad - n_atoms

    b_pad = _round_up(n_batch, 8)        # sublane-aligned crystal rows
    v_pad = _round_up(vocab, 128)        # lane-dense vocabulary (100 -> 128)

    # glue: batch = repeat_interleave(arange(B), num_atoms)
    batch = jnp.repeat(jnp.arange(n_batch, dtype=jnp.int32), num_atoms,
                       total_repeat_length=n_atoms)

    # Padding atoms: atom type 0 (zero one-hot row) and batch id = B.
    at_p = jnp.pad(atom_types.astype(jnp.int32), (0, pad), constant_values=0)
    batch_p = jnp.pad(batch, (0, pad), constant_values=n_batch)

    atom_types_2d = at_p.reshape(n_pad, 1)       # sublane-major (one-hot rows)
    batch_2d = batch_p.reshape(1, n_pad)         # lane-major (assign columns)

    # mean = sum / num_atoms; empty crystals give 0 (not NaN).
    inv = jnp.where(num_atoms > 0,
                    1.0 / jnp.maximum(num_atoms, 1).astype(jnp.float32), 0.0)
    inv_counts = jnp.pad(inv, (0, b_pad - n_batch)).reshape(b_pad, 1)

    # Zero-padded embedding table: padded vocab rows contribute exactly zero.
    emb_p = jnp.pad(emb_table.astype(jnp.float32),
                    ((0, v_pad - vocab), (0, 0)))

    # Per-tile crystal-window offsets (scalar-prefetched into SMEM).
    row_off, window = _crystal_windows(num_atoms, n_atoms, n_batch, tile,
                                       n_grid, b_pad)

    kernel = functools.partial(_comp_embedding_kernel, v_pad=v_pad,
                               window=window)

    cost = pl.CostEstimate(
        flops=2 * window * n_pad * v_pad + 2 * b_pad * v_pad * dim,
        transcendentals=0,
        bytes_accessed=8 * n_pad + 4 * v_pad * dim + 4 * b_pad * (dim + 1),
    )

    out = pl.pallas_call(
        kernel,
        out_shape=jax.ShapeDtypeStruct((b_pad, dim), jnp.float32),
        grid_spec=pltpu.PrefetchScalarGridSpec(
            num_scalar_prefetch=1,
            grid=(n_grid,),
            in_specs=[
                pl.BlockSpec((tile, 1), lambda i, ro: (i, 0)),     # atom_types
                pl.BlockSpec((1, tile), lambda i, ro: (0, i)),     # batch
                pl.BlockSpec((b_pad, 1), lambda i, ro: (0, 0)),    # inv_counts
                pl.BlockSpec((v_pad, dim), lambda i, ro: (0, 0)),  # emb table
            ],
            out_specs=pl.BlockSpec((b_pad, dim), lambda i, ro: (0, 0)),
            scratch_shapes=[pltpu.VMEM((b_pad, v_pad), jnp.float32)],
        ),
        compiler_params=pltpu.CompilerParams(
            dimension_semantics=("arbitrary",),      # N is a reduction axis
            vmem_limit_bytes=32 * 1024 * 1024,       # few-MiB need + headroom
        ),
        cost_estimate=cost,
    )(row_off, atom_types_2d, batch_2d, inv_counts, emb_p)

    return out[:n_batch]


def _reference(atom_types, num_atoms, emb_table):
    n_batch = num_atoms.shape[0]
    batch = jnp.repeat(jnp.arange(n_batch, dtype=jnp.int32), num_atoms,
                       total_repeat_length=atom_types.shape[0])
    atom_emb = emb_table[atom_types - 1]                       # [N, D]
    sums = jax.ops.segment_sum(atom_emb, batch, num_segments=n_batch)
    return sums / num_atoms.astype(jnp.float32)[:, None]


if __name__ == "__main__":
    key = jax.random.PRNGKey(0)
    k_emb, k_types, k_types2, k_types3 = jax.random.split(key, 4)

    n_out = 32          # comp_dim

    # AtomEmbedding init: uniform(-sqrt(3), sqrt(3)), as in CDVAE/GemNet.
    emb_table = jax.random.uniform(
        k_emb, (MAX_ATOMIC_NUM, n_out), dtype=jnp.float32,
        minval=-jnp.sqrt(3.0), maxval=jnp.sqrt(3.0))

    # --- case 1: tiny batch (B=2, 8 atoms) -> single grid step --------------
    num_atoms = jnp.array([3, 5], dtype=jnp.int32)
    n_total = int(num_atoms.sum())
    atom_types = jax.random.randint(
        k_types, (n_total,), minval=1, maxval=MAX_ATOMIC_NUM + 1, dtype=jnp.int32)

    out = jax.block_until_ready(
        comp_embedding_forward(atom_types, num_atoms, emb_table))
    ref = _reference(atom_types, num_atoms, emb_table)
    assert out.shape == (2, n_out)
    assert jnp.allclose(out, ref, atol=1e-5, rtol=1e-5)

    # --- case 2: multi-tile N-reduction with padding (forces 3 grid steps) --
    num_atoms2 = jnp.array([70, 90, 60, 100], dtype=jnp.int32)   # N=320
    n_total2 = int(num_atoms2.sum())
    atom_types2 = jax.random.randint(
        k_types2, (n_total2,), minval=1, maxval=MAX_ATOMIC_NUM + 1, dtype=jnp.int32)

    out2 = jax.block_until_ready(
        comp_embedding_forward(atom_types2, num_atoms2, emb_table, n_tile=128))
    ref2 = _reference(atom_types2, num_atoms2, emb_table)
    assert out2.shape == (4, n_out)
    assert jnp.allclose(out2, ref2, atol=1e-5, rtol=1e-5)

    # --- case 3: many small crystals -> exercises W < B crystal windows -----
    num_atoms3 = jnp.asarray(5 + (np.arange(40) % 7), dtype=jnp.int32)  # N=315
    n_total3 = int(num_atoms3.sum())
    atom_types3 = jax.random.randint(
        k_types3, (n_total3,), minval=1, maxval=MAX_ATOMIC_NUM + 1, dtype=jnp.int32)

    out3 = jax.block_until_ready(
        comp_embedding_forward(atom_types3, num_atoms3, emb_table, n_tile=128))
    ref3 = _reference(atom_types3, num_atoms3, emb_table)
    assert out3.shape == (40, n_out)
    assert jnp.allclose(out3, ref3, atol=1e-5, rtol=1e-5)

    print("KERNEL_OK")
</pallas_src>

<mosaic_0001>
module attributes {stable_mosaic.version = 11 : i64} {
  func.func @_comp_embedding_kernel(%arg0: i32, %arg1: memref<1xi32, #tpu.memory_space<smem>>, %arg2: memref<128x1xi32, #tpu.memory_space<vmem>>, %arg3: memref<1x128xi32, #tpu.memory_space<vmem>>, %arg4: memref<8x1xf32, #tpu.memory_space<vmem>>, %arg5: memref<128x32xf32, #tpu.memory_space<vmem>>, %arg6: memref<8x32xf32, #tpu.memory_space<vmem>>, %arg7: memref<8x128xf32, #tpu.memory_space<vmem>>) attributes {dimension_semantics = [#tpu.dimension_semantics<arbitrary>], iteration_bounds = array<i64: 1>, scalar_prefetch = 1 : i64, scratch_operands = 1 : i64, tpu.core_type = #tpu.core_type<tc>, window_params = [{transform_indices = @transform_0, window_bounds = array<i64: 128, 1>}, {transform_indices = @transform_1, window_bounds = array<i64: 1, 128>}, {pipeline_mode = #tpu.pipeline_mode<synchronous>, transform_indices = @transform_2, window_bounds = array<i64: 8, 1>}, {pipeline_mode = #tpu.pipeline_mode<synchronous>, transform_indices = @transform_3, window_bounds = array<i64: 128, 32>}, {pipeline_mode = #tpu.pipeline_mode<synchronous>, transform_indices = @transform_4, window_bounds = array<i64: 8, 32>}]} {
    %c0_i32 = arith.constant 0 : i32
    %0 = arith.cmpi eq, %arg0, %c0_i32 : i32
    %1 = arith.extui %0 : i1 to i32
    %c0_i32_0 = arith.constant 0 : i32
    %2 = arith.cmpi ne, %1, %c0_i32_0 : i32
    scf.if %2 {
      %cst_8 = arith.constant 0.000000e+00 : f32
      %33 = vector.broadcast %cst_8 : f32 to vector<8x128xf32>
      %c0_9 = arith.constant 0 : index
      %c0_10 = arith.constant 0 : index
      %34 = vector.load %arg7[%c0_9, %c0_10] : memref<8x128xf32, #tpu.memory_space<vmem>>, vector<8x128xf32>
      tpu.vector_store %arg7[%c0_9, %c0_10], %33 {strides = array<i32>} : memref<8x128xf32, #tpu.memory_space<vmem>>, vector<8x128xf32>,
    } else {
    }
    %c0 = arith.constant 0 : index
    %c0_1 = arith.constant 0 : index
    %3 = vector.load %arg2[%c0, %c0_1] : memref<128x1xi32, #tpu.memory_space<vmem>>, vector<128x1xi32>
    %c0_2 = arith.constant 0 : index
    %c0_3 = arith.constant 0 : index
    %4 = vector.load %arg3[%c0_2, %c0_3] : memref<1x128xi32, #tpu.memory_space<vmem>>, vector<1x128xi32>
    %5 = tpu.iota {dimensions = array<i32: 1>} : vector<128x128xi32>
    %c1_i32 = arith.constant 1 : i32
    %6 = vector.broadcast %c1_i32 : i32 to vector<128x1xi32>
    %7 = arith.subi %3, %6 : vector<128x1xi32>
    %8 = vector.broadcast %7 : vector<128x1xi32> to vector<128x128xi32>
    %9 = arith.cmpi eq, %5, %8 : vector<128x128xi32>
    %10 = arith.extui %9 : vector<128x128xi1> to vector<128x128xi32>
    %11 = arith.sitofp %10 : vector<128x128xi32> to vector<128x128xf32>
    %12 = arith.truncf %11 : vector<128x128xf32> to vector<128x128xbf16>
    %13 = arith.index_cast %arg0 : i32 to index
    %14 = memref.load %arg1[%13] : memref<1xi32, #tpu.memory_space<smem>>
    %15 = tpu.assume_multiple %14, 8 : i32
    %16 = tpu.iota {dimensions = array<i32: 0>} : vector<8x128xi32>
    %17 = vector.broadcast %15 : i32 to vector<1x128xi32>
    %18 = arith.subi %4, %17 : vector<1x128xi32>
    %19 = vector.broadcast %18 : vector<1x128xi32> to vector<8x128xi32>
    %20 = arith.cmpi eq, %16, %19 : vector<8x128xi32>
    %21 = arith.extui %20 : vector<8x128xi1> to vector<8x128xi32>
    %22 = arith.sitofp %21 : vector<8x128xi32> to vector<8x128xf32>
    %23 = arith.truncf %22 : vector<8x128xf32> to vector<8x128xbf16>
    %24 = arith.index_cast %15 : i32 to index
    %c0_4 = arith.constant 0 : index
    %25 = vector.load %arg7[%24, %c0_4] : memref<8x128xf32, #tpu.memory_space<vmem>>, vector<8x128xf32>
    %cst = arith.constant dense<0.000000e+00> : vector<8x128xf32>
    %26 = tpu.matmul %23, %12, %cst {dimension_numbers = #tpu.dot_dimension_numbers<[1], [0], [0], [1], [0, 0, 1, 1], [], []>} : vector<8x128xbf16>, vector<128x128xbf16>, vector<8x128xf32> -> vector<8x128xf32>
    %27 = arith.addf %25, %26 : vector<8x128xf32>
    %28 = arith.index_cast %15 : i32 to index
    %c0_5 = arith.constant 0 : index
    %29 = vector.load %arg7[%28, %c0_5] : memref<8x128xf32, #tpu.memory_space<vmem>>, vector<8x128xf32>
    tpu.vector_store %arg7[%28, %c0_5], %27 {strides = array<i32>} : memref<8x128xf32, #tpu.memory_space<vmem>>, vector<8x128xf32>,
    %c0_i32_6 = arith.constant 0 : i32
    %30 = arith.cmpi eq, %arg0, %c0_i32_6 : i32
    %31 = arith.extui %30 : i1 to i32
    %c0_i32_7 = arith.constant 0 : i32
    %32 = arith.cmpi ne, %31, %c0_i32_7 : i32
    scf.if %32 {
      %c0_8 = arith.constant 0 : index
      %c0_9 = arith.constant 0 : index
      %33 = vector.load %arg7[%c0_8, %c0_9] : memref<8x128xf32, #tpu.memory_space<vmem>>, vector<8x128xf32>
      %c0_10 = arith.constant 0 : index
      %c0_11 = arith.constant 0 : index
      %34 = vector.load %arg5[%c0_10, %c0_11] : memref<128x32xf32, #tpu.memory_space<vmem>>, vector<128x32xf32>
      %cst_12 = arith.constant dense<0.000000e+00> : vector<8x32xf32>
      %35 = tpu.matmul %33, %34, %cst_12 {dimension_numbers = #tpu.dot_dimension_numbers<[1], [0], [0], [1], [0, 0, 1, 1], [], []>, precision = #tpu.contract_precision<fp32>} : vector<8x128xf32>, vector<128x32xf32>, vector<8x32xf32> -> vector<8x32xf32>
      %c0_13 = arith.constant 0 : index
      %c0_14 = arith.constant 0 : index
      %36 = vector.load %arg4[%c0_13, %c0_14] : memref<8x1xf32, #tpu.memory_space<vmem>>, vector<8x1xf32>
      %37 = vector.broadcast %36 : vector<8x1xf32> to vector<8x32xf32>
      %38 = arith.mulf %35, %37 : vector<8x32xf32>
      %c0_15 = arith.constant 0 : index
      %c0_16 = arith.constant 0 : index
      %39 = vector.load %arg6[%c0_15, %c0_16] : memref<8x32xf32, #tpu.memory_space<vmem>>, vector<8x32xf32>
      tpu.vector_store %arg6[%c0_15, %c0_16], %38 {strides = array<i32>} : memref<8x32xf32, #tpu.memory_space<vmem>>, vector<8x32xf32>,
    } else {
    }
    return
  }
  func.func @transform_0(%arg0: i32, %arg1: memref<1xi32, #tpu.memory_space<smem>>) -> (i32, i32) {
    %c0_i32 = arith.constant 0 : i32
    %c0_i32_0 = arith.constant 0 : i32
    return %arg0, %c0_i32 : i32, i32
  }
  func.func @transform_1(%arg0: i32, %arg1: memref<1xi32, #tpu.memory_space<smem>>) -> (i32, i32) {
    %c0_i32 = arith.constant 0 : i32
    %c0_i32_0 = arith.constant 0 : i32
    return %c0_i32, %arg0 : i32, i32
  }
  func.func @transform_2(%arg0: i32, %arg1: memref<1xi32, #tpu.memory_space<smem>>) -> (i32, i32) {
    %c0_i32 = arith.constant 0 : i32
    %c0_i32_0 = arith.constant 0 : i32
    %c0_i32_1 = arith.constant 0 : i32
    return %c0_i32, %c0_i32_0 : i32, i32
  }
  func.func @transform_3(%arg0: i32, %arg1: memref<1xi32, #tpu.memory_space<smem>>) -> (i32, i32) {
    %c0_i32 = arith.constant 0 : i32
    %c0_i32_0 = arith.constant 0 : i32
    %c0_i32_1 = arith.constant 0 : i32
    return %c0_i32, %c0_i32_0 : i32, i32
  }
  func.func @transform_4(%arg0: i32, %arg1: memref<1xi32, #tpu.memory_space<smem>>) -> (i32, i32) {
    %c0_i32 = arith.constant 0 : i32
    %c0_i32_0 = arith.constant 0 : i32
    %c0_i32_1 = arith.constant 0 : i32
    return %c0_i32, %c0_i32_0 : i32, i32
  }
}

</mosaic_0001>

<llo_original>
// kernel: tpu_custom_call.1
$region0: #{tpu_custom_call.1}
  #allocation0 [shape = 'u32[]', space=smem, size = 0x4, offset = 0x4, fixed_abs, tag = 'smem constant byte address 0x4 - core index']
  #allocation1 [shape = 'u32[72,128]{1,0:T(1,128)}', space=vmem, size = 0x9000, scoped, tag = 'internal scratch']
  #allocation2 [shape = 'f32[8,128]{1,0:T(8,128)}', space=vmem, size = 0x1000, scoped, tag = 'scratch operand']
  #allocation3 [shape = 's32[1]{0}', space=sflag, size = 0x4, scoped, tag = 'scoped memory for tpu_custom_call.1']
  #allocation4 [shape = 's32[1]{0:T(128)S(6)}', space=smem, size = 0x200, scoped, tag = 'prefetched SMEM operand 0']
  %s0 = inlined_call_operand.<no memory space> [shape: s32[1], index: 0, kind: input, shape index: {}]
  %s1 = inlined_call_operand.vmem [shape: s32[128,1], index: 1, kind: input, shape index: {}]
  %s2 = inlined_call_operand.vmem [shape: s32[1,128], index: 2, kind: input, shape index: {}]
  %s3 = inlined_call_operand.vmem [shape: f32[8,1], index: 3, kind: input, shape index: {}]
  %s4 = inlined_call_operand.vmem [shape: f32[128,32], index: 4, kind: input, shape index: {}]
  %s5 = inlined_call_operand.hbm [shape: f32[8,32], index: 5, kind: output, shape index: {}]
  %s6 = sld [smem:[#allocation0]]
  $region34: #{tpu_custom_call.1} parent=0
    _
  %s8 = ssub.s32 1, %s6
  %s9 = scalar_select 0, %s8, %s6
  %10 = sst [smem:[#allocation4]] %s0
  $region1: #{tpu_custom_call.1} parent=0
    #allocation5 [shape = 'u8[4096]{0}', space=vmem, size = 0x1000, scoped, tag = 'output window, operand 0, single buffered']
    #allocation6 [shape = 's32[1]{0}', space=sflag, size = 0x4, scoped, tag = 'scoped memory for tpu_custom_call.1']
    %11 = vsyncpa [#allocation6], 0
    // Predicated region
    $region2: #{tpu_custom_call.1} parent=1 // pred_check
      _
    $region3: #{tpu_custom_call.1} parent=1 // pred_check_branch
      %13 = sbr.rel (0) target = $region5
    $region4: #{tpu_custom_call.1} parent=1 // pred_region
      _
    $region5: #{tpu_custom_call.1} parent=1 // pred_fallthru
      _
    // Predicated region
    $region6: #{tpu_custom_call.1} parent=1 // pred_check
      _
    $region7: #{tpu_custom_call.1} parent=1 // pred_check_branch
      %15 = sbr.rel (0) target = $region9
    $region8: #{tpu_custom_call.1} parent=1 // pred_region
      _
    $region9: #{tpu_custom_call.1} parent=1 // pred_fallthru
      _
    // Predicated region
    $region10: #{tpu_custom_call.1} parent=1 // pred_check
      _
    $region11: #{tpu_custom_call.1} parent=1 // pred_check_branch
      %17 = sbr.rel (0) target = $region13
    $region12: #{tpu_custom_call.1} parent=1 // pred_region
      _
    $region13: #{tpu_custom_call.1} parent=1 // pred_fallthru
      _
    // Predicated region
    $region14: #{tpu_custom_call.1} parent=1 // pred_check
      _
    $region15: #{tpu_custom_call.1} parent=1 // pred_check_branch
      %19 = sbr.rel (0) target = $region17
    $region16: #{tpu_custom_call.1} parent=1 // pred_region
      _
    $region17: #{tpu_custom_call.1} parent=1 // pred_fallthru
      _
    %p20 = scmp.eq.s32.totalorder 0, 0
    // Predicated region
    $region18: #{tpu_custom_call.1} parent=1 // pred_check
      %p21 = pneg %p20
    $region19: #{tpu_custom_call.1} parent=1 // pred_check_branch
      %23 = sbr.rel (%p21) target = $region21
    $region20: #{tpu_custom_call.1} parent=1 // pred_region
      %24 = vst [vmem:[#allocation2] sm:$0xff] 0.0
    $region21: #{tpu_custom_call.1} parent=1 // pred_fallthru
      _
    %v25 = vld [vmem:[%s1] sm:$0xff]
    %v26 = vld [vmem:[%s1 + $0x8] sm:$0xff]
    %v27 = vld [vmem:[%s1 + $0x10] sm:$0xff]
    %v28 = vld [vmem:[%s1 + $0x18] sm:$0xff]
    %v29 = vld [vmem:[%s1 + $0x20] sm:$0xff]
    %v30 = vld [vmem:[%s1 + $0x28] sm:$0xff]
    %v31 = vld [vmem:[%s1 + $0x30] sm:$0xff]
    %v32 = vld [vmem:[%s1 + $0x38] sm:$0xff]
    %v33 = vld [vmem:[%s1 + $0x40] sm:$0xff]
    %v34 = vld [vmem:[%s1 + $0x48] sm:$0xff]
    %v35 = vld [vmem:[%s1 + $0x50] sm:$0xff]
    %v36 = vld [vmem:[%s1 + $0x58] sm:$0xff]
    %v37 = vld [vmem:[%s1 + $0x60] sm:$0xff]
    %v38 = vld [vmem:[%s1 + $0x68] sm:$0xff]
    %v39 = vld [vmem:[%s1 + $0x70] sm:$0xff]
    %v40 = vld [vmem:[%s1 + $0x78] sm:$0xff]
    %v41 = vld [vmem:[%s2] sm:$0x1]
    %v42 = vlaneseq
    %v43 = vand.u32 %v42, 127
    %v44 = vsub.s32 %v25, 1
    %v45 = vsub.s32 %v26, 1
    %v46 = vsub.s32 %v27, 1
    %v47 = vsub.s32 %v28, 1
    %v48 = vsub.s32 %v29, 1
    %v49 = vsub.s32 %v30, 1
    %v50 = vsub.s32 %v31, 1
    %v51 = vsub.s32 %v32, 1
    %v52 = vsub.s32 %v33, 1
    %v53 = vsub.s32 %v34, 1
    %v54 = vsub.s32 %v35, 1
    %v55 = vsub.s32 %v36, 1
    %v56 = vsub.s32 %v37, 1
    %v57 = vsub.s32 %v38, 1
    %v58 = vsub.s32 %v39, 1
    %v59 = vsub.s32 %v40, 1
    %60 = vset.pattern.permute.xlu0 0
    %61 = vperm.xlu0 %60, %v44
    %v62 = vpop.permute.xlu0 %61
    %63 = vset.pattern.permute.xlu0 0
    %64 = vperm.xlu0 %63, %v45
    %v65 = vpop.permute.xlu0 %64
    %66 = vset.pattern.permute.xlu0 0
    %67 = vperm.xlu0 %66, %v46
    %v68 = vpop.permute.xlu0 %67
    %69 = vset.pattern.permute.xlu0 0
    %70 = vperm.xlu0 %69, %v47
    %v71 = vpop.permute.xlu0 %70
    %72 = vset.pattern.permute.xlu0 0
    %73 = vperm.xlu0 %72, %v48
    %v74 = vpop.permute.xlu0 %73
    %75 = vset.pattern.permute.xlu0 0
    %76 = vperm.xlu0 %75, %v49
    %v77 = vpop.permute.xlu0 %76
    %78 = vset.pattern.permute.xlu0 0
    %79 = vperm.xlu0 %78, %v50
    %v80 = vpop.permute.xlu0 %79
    %81 = vset.pattern.permute.xlu0 0
    %82 = vperm.xlu0 %81, %v51
    %v83 = vpop.permute.xlu0 %82
    %84 = vset.pattern.permute.xlu0 0
    %85 = vperm.xlu0 %84, %v52
    %v86 = vpop.permute.xlu0 %85
    %87 = vset.pattern.permute.xlu0 0
    %88 = vperm.xlu0 %87, %v53
    %v89 = vpop.permute.xlu0 %88
    %90 = vset.pattern.permute.xlu0 0
    %91 = vperm.xlu0 %90, %v54
    %v92 = vpop.permute.xlu0 %91
    %93 = vset.pattern.permute.xlu0 0
    %94 = vperm.xlu0 %93, %v55
    %v95 = vpop.permute.xlu0 %94
    %96 = vset.pattern.permute.xlu0 0
    %97 = vperm.xlu0 %96, %v56
    %v98 = vpop.permute.xlu0 %97
    %99 = vset.pattern.permute.xlu0 0
    %100 = vperm.xlu0 %99, %v57
    %v101 = vpop.permute.xlu0 %100
    %102 = vset.pattern.permute.xlu0 0
    %103 = vperm.xlu0 %102, %v58
    %v104 = vpop.permute.xlu0 %103
    %105 = vset.pattern.permute.xlu0 0
    %106 = vperm.xlu0 %105, %v59
    %v107 = vpop.permute.xlu0 %106
    %vm108 = vcmp.eq.s32.totalorder %v43, %v62
    %vm109 = vcmp.eq.s32.totalorder %v43, %v65
    %vm110 = vcmp.eq.s32.totalorder %v43, %v68
    %vm111 = vcmp.eq.s32.totalorder %v43, %v71
    %vm112 = vcmp.eq.s32.totalorder %v43, %v74
    %vm113 = vcmp.eq.s32.totalorder %v43, %v77
    %vm114 = vcmp.eq.s32.totalorder %v43, %v80
    %vm115 = vcmp.eq.s32.totalorder %v43, %v83
    %vm116 = vcmp.eq.s32.totalorder %v43, %v86
    %vm117 = vcmp.eq.s32.totalorder %v43, %v89
    %vm118 = vcmp.eq.s32.totalorder %v43, %v92
    %vm119 = vcmp.eq.s32.totalorder %v43, %v95
    %vm120 = vcmp.eq.s32.totalorder %v43, %v98
    %vm121 = vcmp.eq.s32.totalorder %v43, %v101
    %vm122 = vcmp.eq.s32.totalorder %v43, %v104
    %vm123 = vcmp.eq.s32.totalorder %v43, %v107
    %v124 = vsel %vm108, 1, 0
    %v125 = vsel %vm109, 1, 0
    %v126 = vsel %vm110, 1, 0
    %v127 = vsel %vm111, 1, 0
    %v128 = vsel %vm112, 1, 0
    %v129 = vsel %vm113, 1, 0
    %v130 = vsel %vm114, 1, 0
    %v131 = vsel %vm115, 1, 0
    %v132 = vsel %vm116, 1, 0
    %v133 = vsel %vm117, 1, 0
    %v134 = vsel %vm118, 1, 0
    %v135 = vsel %vm119, 1, 0
    %v136 = vsel %vm120, 1, 0
    %v137 = vsel %vm121, 1, 0
    %v138 = vsel %vm122, 1, 0
    %v139 = vsel %vm123, 1, 0
    %v140 = vcvt.s32.f32 %v124
    %v141 = vcvt.s32.f32 %v125
    %v142 = vcvt.s32.f32 %v126
    %v143 = vcvt.s32.f32 %v127
    %v144 = vcvt.s32.f32 %v128
    %v145 = vcvt.s32.f32 %v129
    %v146 = vcvt.s32.f32 %v130
    %v147 = vcvt.s32.f32 %v131
    %v148 = vcvt.s32.f32 %v132
    %v149 = vcvt.s32.f32 %v133
    %v150 = vcvt.s32.f32 %v134
    %v151 = vcvt.s32.f32 %v135
    %v152 = vcvt.s32.f32 %v136
    %v153 = vcvt.s32.f32 %v137
    %v154 = vcvt.s32.f32 %v138
    %v155 = vcvt.s32.f32 %v139
    %v156 = vpack.c.bf16 %v141, %v140
    %v157 = vpack.c.bf16 %v143, %v142
    %v158 = vpack.c.bf16 %v145, %v144
    %v159 = vpack.c.bf16 %v147, %v146
    %v160 = vpack.c.bf16 %v149, %v148
    %v161 = vpack.c.bf16 %v151, %v150
    %v162 = vpack.c.bf16 %v153, %v152
    %v163 = vpack.c.bf16 %v155, %v154
    %s164 = sld [smem:[#allocation4]]
    %v165 = vlaneseq
    %v166 = vshrl.u32 %v165, 7
    %v167 = vstv %s164
    %v168 = vsub.s32 %v41, %v167
    %v169 = vperm.slane %v168, 0
    %vm170 = vcmp.eq.s32.totalorder %v166, %v169
    %v171 = vsel %vm170, 1, 0
    %v172 = vcvt.s32.f32 %v171
    %v173 = vpack.c.bf16 %v172, %v172
    %s174 = scalar_lea.vmem [#allocation2], %s164
    %v175 = vld [vmem:[%s174] sm:$0xff]
    %176 = vmatpush.bf16.msra.mxu0 %v163
    %177 = vmatpush.bf16.msra.mxu0 %v162
    %178 = vmatpush.bf16.msra.mxu0 %v161
    %179 = vmatpush.bf16.msra.mxu0 %v160
    %180 = vmatpush.bf16.msra.mxu0 %v159
    %181 = vmatpush.bf16.msra.mxu0 %v158
    %182 = vmatpush.bf16.msra.mxu0 %v157
    %183 = vmatpush.bf16.msra.mxu0 %v156
    %184 = vmatmul.bf16.gmra.mxu0 %v173
    %v185 = vpop.f32.mrf.mxu0
    %v186 = vadd.f32 0.0, %v185
    %v187 = vpop.f32.mrf.mxu0
    %188 = vdwg.mxu0
    %v189 = vadd.f32 %v175, %v186
    %190 = vst [vmem:[%s174] sm:$0xff] %v189
    // Predicated region
    $region22: #{tpu_custom_call.1} parent=1 // pred_check
      %p191 = pneg %p20
    $region23: #{tpu_custom_call.1} parent=1 // pred_check_branch
      %193 = sbr.rel (%p191) target = $region25
    $region24: #{tpu_custom_call.1} parent=1 // pred_region
      %v194 = vld [vmem:[#allocation2] sm:$0xff]
      %v195 = vld [vmem:[%s4] sm:$0xff]
      %v196 = vld [vmem:[%s4 + $0x8] sm:$0xff]
      %v197 = vld [vmem:[%s4 + $0x10] sm:$0xff]
      %v198 = vld [vmem:[%s4 + $0x18] sm:$0xff]
      %v199 = vld [vmem:[%s4 + $0x20] sm:$0xff]
      %v200 = vld [vmem:[%s4 + $0x28] sm:$0xff]
      %v201 = vld [vmem:[%s4 + $0x30] sm:$0xff]
      %v202 = vld [vmem:[%s4 + $0x38] sm:$0xff]
      %v203 = vld [vmem:[%s4 + $0x40] sm:$0xff]
      %v204 = vld [vmem:[%s4 + $0x48] sm:$0xff]
      %v205 = vld [vmem:[%s4 + $0x50] sm:$0xff]
      %v206 = vld [vmem:[%s4 + $0x58] sm:$0xff]
      %v207 = vld [vmem:[%s4 + $0x60] sm:$0xff]
      %v208 = vld [vmem:[%s4 + $0x68] sm:$0xff]
      %v209 = vld [vmem:[%s4 + $0x70] sm:$0xff]
      %v210 = vld [vmem:[%s4 + $0x78] sm:$0xff]
      %v211 = vand.u32 %v210, 4294901760
      %212 = vmatpush.msra.mxu0 %v211
      %v213 = vand.u32 %v209, 4294901760
      %214 = vmatpush.msra.mxu0 %v213
      %v215 = vand.u32 %v208, 4294901760
      %216 = vmatpush.msra.mxu0 %v215
      %v217 = vand.u32 %v207, 4294901760
      %218 = vmatpush.msra.mxu0 %v217
      %v219 = vand.u32 %v206, 4294901760
      %220 = vmatpush.msra.mxu0 %v219
      %v221 = vand.u32 %v205, 4294901760
      %222 = vmatpush.msra.mxu0 %v221
      %v223 = vand.u32 %v204, 4294901760
      %224 = vmatpush.msra.mxu0 %v223
      %v225 = vand.u32 %v203, 4294901760
      %226 = vmatpush.msra.mxu0 %v225
      %v227 = vand.u32 %v202, 4294901760
      %228 = vmatpush.msra.mxu0 %v227
      %v229 = vand.u32 %v201, 4294901760
      %230 = vmatpush.msra.mxu0 %v229
      %v231 = vand.u32 %v200, 4294901760
      %232 = vmatpush.msra.mxu0 %v231
      %v233 = vand.u32 %v199, 4294901760
      %234 = vmatpush.msra.mxu0 %v233
      %v235 = vand.u32 %v198, 4294901760
      %236 = vmatpush.msra.mxu0 %v235
      %v237 = vand.u32 %v197, 4294901760
      %238 = vmatpush.msra.mxu0 %v237
      %v239 = vand.u32 %v196, 4294901760
      %240 = vmatpush.msra.mxu0 %v239
      %v241 = vand.u32 %v195, 4294901760
      %242 = vmatpush.msra.mxu0 %v241
      %v243 = vand.u32 %v194, 4294901760
      %v244 = vsub.f32 %v194, %v243
      %v245 = vand.u32 %v244, 4294901760
      %v246 = vsub.f32 %v244, %v245
      %v247 = vand.u32 %v246, 4294901760
      %248 = vmatmul.f32.gmra.mxu0 %v247
      %v249 = vpop.f32.mrf.mxu0
      %v250 = vadd.f32 0.0, %v249
      %251 = vdwg.mxu0
      %v252 = vand.u32 %v210, 4294901760
      %v253 = vsub.f32 %v210, %v252
      %v254 = vand.u32 %v253, 4294901760
      %v255 = vsub.f32 %v253, %v254
      %v256 = vand.u32 %v255, 4294901760
      %257 = vmatpush.msra.mxu0 %v256
      %v258 = vand.u32 %v209, 4294901760
      %v259 = vsub.f32 %v209, %v258
      %v260 = vand.u32 %v259, 4294901760
      %v261 = vsub.f32 %v259, %v260
      %v262 = vand.u32 %v261, 4294901760
      %263 = vmatpush.msra.mxu0 %v262
      %v264 = vand.u32 %v208, 4294901760
      %v265 = vsub.f32 %v208, %v264
      %v266 = vand.u32 %v265, 4294901760
      %v267 = vsub.f32 %v265, %v266
      %v268 = vand.u32 %v267, 4294901760
      %269 = vmatpush.msra.mxu0 %v268
      %v270 = vand.u32 %v207, 4294901760
      %v271 = vsub.f32 %v207, %v270
      %v272 = vand.u32 %v271, 4294901760
      %v273 = vsub.f32 %v271, %v272
      %v274 = vand.u32 %v273, 4294901760
      %275 = vmatpush.msra.mxu0 %v274
      %v276 = vand.u32 %v206, 4294901760
      %v277 = vsub.f32 %v206, %v276
      %v278 = vand.u32 %v277, 4294901760
      %v279 = vsub.f32 %v277, %v278
      %v280 = vand.u32 %v279, 4294901760
      %281 = vmatpush.msra.mxu0 %v280
      %v282 = vand.u32 %v205, 4294901760
      %v283 = vsub.f32 %v205, %v282
      %v284 = vand.u32 %v283, 4294901760
      %v285 = vsub.f32 %v283, %v284
      %v286 = vand.u32 %v285, 4294901760
      %287 = vmatpush.msra.mxu0 %v286
      %v288 = vand.u32 %v204, 4294901760
      %v289 = vsub.f32 %v204, %v288
      %v290 = vand.u32 %v289, 4294901760
      %v291 = vsub.f32 %v289, %v290
      %v292 = vand.u32 %v291, 4294901760
      %293 = vmatpush.msra.mxu0 %v292
      %v294 = vand.u32 %v203, 4294901760
      %v295 = vsub.f32 %v203, %v294
      %v296 = vand.u32 %v295, 4294901760
      %v297 = vsub.f32 %v295, %v296
      %v298 = vand.u32 %v297, 4294901760
      %299 = vmatpush.msra.mxu0 %v298
      %v300 = vand.u32 %v202, 4294901760
      %v301 = vsub.f32 %v202, %v300
      %v302 = vand.u32 %v301, 4294901760
      %v303 = vsub.f32 %v301, %v302
      %v304 = vand.u32 %v303, 4294901760
      %305 = vmatpush.msra.mxu0 %v304
      %v306 = vand.u32 %v201, 4294901760
      %v307 = vsub.f32 %v201, %v306
      %v308 = vand.u32 %v307, 4294901760
      %v309 = vsub.f32 %v307, %v308
      %v310 = vand.u32 %v309, 4294901760
      %311 = vmatpush.msra.mxu0 %v310
      %v312 = vand.u32 %v200, 4294901760
      %v313 = vsub.f32 %v200, %v312
      %v314 = vand.u32 %v313, 4294901760
      %v315 = vsub.f32 %v313, %v314
      %v316 = vand.u32 %v315, 4294901760
      %317 = vmatpush.msra.mxu0 %v316
      %v318 = vand.u32 %v199, 4294901760
      %v319 = vsub.f32 %v199, %v318
      %v320 = vand.u32 %v319, 4294901760
      %v321 = vsub.f32 %v319, %v320
      %v322 = vand.u32 %v321, 4294901760
      %323 = vmatpush.msra.mxu0 %v322
      %v324 = vand.u32 %v198, 4294901760
      %v325 = vsub.f32 %v198, %v324
      %v326 = vand.u32 %v325, 4294901760
      %v327 = vsub.f32 %v325, %v326
      %v328 = vand.u32 %v327, 4294901760
      %329 = vmatpush.msra.mxu0 %v328
      %v330 = vand.u32 %v197, 4294901760
      %v331 = vsub.f32 %v197, %v330
      %v332 = vand.u32 %v331, 4294901760
      %v333 = vsub.f32 %v331, %v332
      %v334 = vand.u32 %v333, 4294901760
      %335 = vmatpush.msra.mxu0 %v334
      %v336 = vand.u32 %v196, 4294901760
      %v337 = vsub.f32 %v196, %v336
      %v338 = vand.u32 %v337, 4294901760
      %v339 = vsub.f32 %v337, %v338
      %v340 = vand.u32 %v339, 4294901760
      %341 = vmatpush.msra.mxu0 %v340
      %v342 = vand.u32 %v195, 4294901760
      %v343 = vsub.f32 %v195, %v342
      %v344 = vand.u32 %v343, 4294901760
      %v345 = vsub.f32 %v343, %v344
      %v346 = vand.u32 %v345, 4294901760
      %347 = vmatpush.msra.mxu0 %v346
      %v348 = vand.u32 %v194, 4294901760
      %349 = vmatmul.f32.gmra.mxu0 %v348
      %v350 = vpop.f32.mrf.mxu0
      %v351 = vadd.f32 %v250, %v350
      %352 = vdwg.mxu0
      %v353 = vand.u32 %v210, 4294901760
      %v354 = vsub.f32 %v210, %v353
      %355 = vmatpush.msra.mxu0 %v354
      %v356 = vand.u32 %v209, 4294901760
      %v357 = vsub.f32 %v209, %v356
      %358 = vmatpush.msra.mxu0 %v357
      %v359 = vand.u32 %v208, 4294901760
      %v360 = vsub.f32 %v208, %v359
      %361 = vmatpush.msra.mxu0 %v360
      %v362 = vand.u32 %v207, 4294901760
      %v363 = vsub.f32 %v207, %v362
      %364 = vmatpush.msra.mxu0 %v363
      %v365 = vand.u32 %v206, 4294901760
      %v366 = vsub.f32 %v206, %v365
      %367 = vmatpush.msra.mxu0 %v366
      %v368 = vand.u32 %v205, 4294901760
      %v369 = vsub.f32 %v205, %v368
      %370 = vmatpush.msra.mxu0 %v369
      %v371 = vand.u32 %v204, 4294901760
      %v372 = vsub.f32 %v204, %v371
      %373 = vmatpush.msra.mxu0 %v372
      %v374 = vand.u32 %v203, 4294901760
      %v375 = vsub.f32 %v203, %v374
      %376 = vmatpush.msra.mxu0 %v375
      %v377 = vand.u32 %v202, 4294901760
      %v378 = vsub.f32 %v202, %v377
      %379 = vmatpush.msra.mxu0 %v378
      %v380 = vand.u32 %v201, 4294901760
      %v381 = vsub.f32 %v201, %v380
      %382 = vmatpush.msra.mxu0 %v381
      %v383 = vand.u32 %v200, 4294901760
      %v384 = vsub.f32 %v200, %v383
      %385 = vmatpush.msra.mxu0 %v384
      %v386 = vand.u32 %v199, 4294901760
      %v387 = vsub.f32 %v199, %v386
      %388 = vmatpush.msra.mxu0 %v387
      %v389 = vand.u32 %v198, 4294901760
      %v390 = vsub.f32 %v198, %v389
      %391 = vmatpush.msra.mxu0 %v390
      %v392 = vand.u32 %v197, 4294901760
      %v393 = vsub.f32 %v197, %v392
      %394 = vmatpush.msra.mxu0 %v393
      %v395 = vand.u32 %v196, 4294901760
      %v396 = vsub.f32 %v196, %v395
      %397 = vmatpush.msra.mxu0 %v396
      %v398 = vand.u32 %v195, 4294901760
      %v399 = vsub.f32 %v195, %v398
      %400 = vmatpush.msra.mxu0 %v399
      %v401 = vand.u32 %v194, 4294901760
      %v402 = vsub.f32 %v194, %v401
      %403 = vmatmul.f32.gmra.mxu0 %v402
      %v404 = vpop.f32.mrf.mxu0
      %v405 = vadd.f32 %v351, %v404
      %406 = vdwg.mxu0
      %v407 = vand.u32 %v210, 4294901760
      %408 = vmatpush.msra.mxu0 %v407
      %v409 = vand.u32 %v209, 4294901760
      %410 = vmatpush.msra.mxu0 %v409
      %v411 = vand.u32 %v208, 4294901760
      %412 = vmatpush.msra.mxu0 %v411
      %v413 = vand.u32 %v207, 4294901760
      %414 = vmatpush.msra.mxu0 %v413
      %v415 = vand.u32 %v206, 4294901760
      %416 = vmatpush.msra.mxu0 %v415
      %v417 = vand.u32 %v205, 4294901760
      %418 = vmatpush.msra.mxu0 %v417
      %v419 = vand.u32 %v204, 4294901760
      %420 = vmatpush.msra.mxu0 %v419
      %v421 = vand.u32 %v203, 4294901760
      %422 = vmatpush.msra.mxu0 %v421
      %v423 = vand.u32 %v202, 4294901760
      %424 = vmatpush.msra.mxu0 %v423
      %v425 = vand.u32 %v201, 4294901760
      %426 = vmatpush.msra.mxu0 %v425
      %v427 = vand.u32 %v200, 4294901760
      %428 = vmatpush.msra.mxu0 %v427
      %v429 = vand.u32 %v199, 4294901760
      %430 = vmatpush.msra.mxu0 %v429
      %v431 = vand.u32 %v198, 4294901760
      %432 = vmatpush.msra.mxu0 %v431
      %v433 = vand.u32 %v197, 4294901760
      %434 = vmatpush.msra.mxu0 %v433
      %v435 = vand.u32 %v196, 4294901760
      %436 = vmatpush.msra.mxu0 %v435
      %v437 = vand.u32 %v195, 4294901760
      %438 = vmatpush.msra.mxu0 %v437
      %v439 = vand.u32 %v194, 4294901760
      %v440 = vsub.f32 %v194, %v439
      %v441 = vand.u32 %v440, 4294901760
      %442 = vmatmul.f32.gmra.mxu0 %v441
      %v443 = vpop.f32.mrf.mxu0
      %v444 = vadd.f32 %v405, %v443
      %445 = vdwg.mxu0
      %v446 = vand.u32 %v210, 4294901760
      %v447 = vsub.f32 %v210, %v446
      %v448 = vand.u32 %v447, 4294901760
      %449 = vmatpush.msra.mxu0 %v448
      %v450 = vand.u32 %v209, 4294901760
      %v451 = vsub.f32 %v209, %v450
      %v452 = vand.u32 %v451, 4294901760
      %453 = vmatpush.msra.mxu0 %v452
      %v454 = vand.u32 %v208, 4294901760
      %v455 = vsub.f32 %v208, %v454
      %v456 = vand.u32 %v455, 4294901760
      %457 = vmatpush.msra.mxu0 %v456
      %v458 = vand.u32 %v207, 4294901760
      %v459 = vsub.f32 %v207, %v458
      %v460 = vand.u32 %v459, 4294901760
      %461 = vmatpush.msra.mxu0 %v460
      %v462 = vand.u32 %v206, 4294901760
      %v463 = vsub.f32 %v206, %v462
      %v464 = vand.u32 %v463, 4294901760
      %465 = vmatpush.msra.mxu0 %v464
      %v466 = vand.u32 %v205, 4294901760
      %v467 = vsub.f32 %v205, %v466
      %v468 = vand.u32 %v467, 4294901760
      %469 = vmatpush.msra.mxu0 %v468
      %v470 = vand.u32 %v204, 4294901760
      %v471 = vsub.f32 %v204, %v470
      %v472 = vand.u32 %v471, 4294901760
      %473 = vmatpush.msra.mxu0 %v472
      %v474 = vand.u32 %v203, 4294901760
      %v475 = vsub.f32 %v203, %v474
      %v476 = vand.u32 %v475, 4294901760
      %477 = vmatpush.msra.mxu0 %v476
      %v478 = vand.u32 %v202, 4294901760
      %v479 = vsub.f32 %v202, %v478
      %v480 = vand.u32 %v479, 4294901760
      %481 = vmatpush.msra.mxu0 %v480
      %v482 = vand.u32 %v201, 4294901760
      %v483 = vsub.f32 %v201, %v482
      %v484 = vand.u32 %v483, 4294901760
      %485 = vmatpush.msra.mxu0 %v484
      %v486 = vand.u32 %v200, 4294901760
      %v487 = vsub.f32 %v200, %v486
      %v488 = vand.u32 %v487, 4294901760
      %489 = vmatpush.msra.mxu0 %v488
      %v490 = vand.u32 %v199, 4294901760
      %v491 = vsub.f32 %v199, %v490
      %v492 = vand.u32 %v491, 4294901760
      %493 = vmatpush.msra.mxu0 %v492
      %v494 = vand.u32 %v198, 4294901760
      %v495 = vsub.f32 %v198, %v494
      %v496 = vand.u32 %v495, 4294901760
      %497 = vmatpush.msra.mxu0 %v496
      %v498 = vand.u32 %v197, 4294901760
      %v499 = vsub.f32 %v197, %v498
      %v500 = vand.u32 %v499, 4294901760
      %501 = vmatpush.msra.mxu0 %v500
      %v502 = vand.u32 %v196, 4294901760
      %v503 = vsub.f32 %v196, %v502
      %v504 = vand.u32 %v503, 4294901760
      %505 = vmatpush.msra.mxu0 %v504
      %v506 = vand.u32 %v195, 4294901760
      %v507 = vsub.f32 %v195, %v506
      %v508 = vand.u32 %v507, 4294901760
      %509 = vmatpush.msra.mxu0 %v508
      %v510 = vand.u32 %v194, 4294901760
      %511 = vmatmul.f32.gmra.mxu0 %v510
      %v512 = vpop.f32.mrf.mxu0
      %v513 = vadd.f32 %v444, %v512
      %514 = vdwg.mxu0
      %v515 = vand.u32 %v210, 4294901760
      %516 = vmatpush.msra.mxu0 %v515
      %v517 = vand.u32 %v209, 4294901760
      %518 = vmatpush.msra.mxu0 %v517
      %v519 = vand.u32 %v208, 4294901760
      %520 = vmatpush.msra.mxu0 %v519
      %v521 = vand.u32 %v207, 4294901760
      %522 = vmatpush.msra.mxu0 %v521
      %v523 = vand.u32 %v206, 4294901760
      %524 = vmatpush.msra.mxu0 %v523
      %v525 = vand.u32 %v205, 4294901760
      %526 = vmatpush.msra.mxu0 %v525
      %v527 = vand.u32 %v204, 4294901760
      %528 = vmatpush.msra.mxu0 %v527
      %v529 = vand.u32 %v203, 4294901760
      %530 = vmatpush.msra.mxu0 %v529
      %v531 = vand.u32 %v202, 4294901760
      %532 = vmatpush.msra.mxu0 %v531
      %v533 = vand.u32 %v201, 4294901760
      %534 = vmatpush.msra.mxu0 %v533
      %v535 = vand.u32 %v200, 4294901760
      %536 = vmatpush.msra.mxu0 %v535
      %v537 = vand.u32 %v199, 4294901760
      %538 = vmatpush.msra.mxu0 %v537
      %v539 = vand.u32 %v198, 4294901760
      %540 = vmatpush.msra.mxu0 %v539
      %v541 = vand.u32 %v197, 4294901760
      %542 = vmatpush.msra.mxu0 %v541
      %v543 = vand.u32 %v196, 4294901760
      %544 = vmatpush.msra.mxu0 %v543
      %v545 = vand.u32 %v195, 4294901760
      %546 = vmatpush.msra.mxu0 %v545
      %v547 = vand.u32 %v194, 4294901760
      %548 = vmatmul.f32.gmra.mxu0 %v547
      %v549 = vpop.f32.mrf.mxu0
      %v550 = vadd.f32 %v513, %v549
      %551 = vdwg.mxu0
      %v552 = vld [vmem:[%s3] sm:$0xff]
      %554 = vset.pattern.permute.xlu0 0
      %555 = vperm.xlu0 %554, %v552
      %v556 = vpop.permute.xlu0 %555
      %v558 = vmul.f32 %v550, %v556
      %vm559 = vcmask 261120
      %560 = vst.msk [vmem:[#allocation5] sm:$0xff] %vm559, %v558
    $region25: #{tpu_custom_call.1} parent=1 // pred_fallthru
      _
    // Predicated region
    $region26: #{tpu_custom_call.1} parent=1 // pred_check
      _
    $region27: #{tpu_custom_call.1} parent=1 // pred_check_branch
      %562 = sbr.rel (0) target = $region29
    $region28: #{tpu_custom_call.1} parent=1 // pred_region
      %564 = vsyncadd [#allocation6], 0
      %s566 = sshll.u32 [#allocation5], 4
      %s567 = int_to_ptr.vmem [resolvable:$true] %s566
      %s568 = sshll.u32 %s5, 4
      %s569 = int_to_ptr.hbm [resolvable:$true] %s568
      %571 = dma.vmem_to_hbm [thread:$0]  %s567, 128, %s569, [#allocation6]
    $region29: #{tpu_custom_call.1} parent=1 // pred_fallthru
      _
    // Predicated region
    $region30: #{tpu_custom_call.1} parent=1 // pred_check
      _
    $region31: #{tpu_custom_call.1} parent=1 // pred_check_branch
      %573 = sbr.rel (0) target = $region33
    $region32: #{tpu_custom_call.1} parent=1 // pred_region
      %575 = dma.done [#allocation6], 128
    $region33: #{tpu_custom_call.1} parent=1 // pred_fallthru
      _
    %576 = vsyncpa [#allocation6], 1

</llo_original>
